<compile_context>
chip_gen: v7x
topology: tpu7x:2x2x1
jax: 0.10.0
libtpu: 0.0.40
codegen_flags: <defaults>
</compile_context>

<pallas_src>
import jax
import jax.numpy as jnp
from jax.experimental import pallas as pl
from jax.experimental.pallas import tpu as pltpu

# ---- module hyper-parameters (number_of_layers == 2 branch) ------------------
NUMBER_CLASSES = 4        # number_classes
LAYER_1_SIZE = 32         # config['layer_1_size']  (linear1 out, rnn1 hidden)
FINAL_LAYER_SIZE = 2000   # data == 'raw'
F_PAD = 2048              # lane-dense padding of the output feature axis
TILE_F = 2048             # output tile; grid = (F_PAD // TILE_F,) = (1,)
GATE_LANES = 128          # each live gate (i, g, o) gets its own 128-lane block
BATCH = 2


def lstm_decoder_kernel(x_ref, wg_ref, bg_ref, w2_ref, b2_ref, out_ref):
    """Fused (folded linear1 + single LSTM step w/ zero input & cell) + linear2 tile."""
    H = LAYER_1_SIZE
    GL = GATE_LANES
    x = x_ref[...]                                                    # (B, C) f32

    # All three live gates (i, g, o) in one MXU push; linear1 is folded into wg/bg.
    # Gates are padded to 128-lane blocks so the slices below are vreg-aligned.
    gates = jnp.dot(x, wg_ref[...], preferred_element_type=jnp.float32) + bg_ref[...]

    i_g = jax.nn.sigmoid(gates[:, 0 * GL:1 * GL])                     # (B, 128)
    g_g = jnp.tanh(gates[:, 1 * GL:2 * GL])
    o_g = jax.nn.sigmoid(gates[:, 2 * GL:3 * GL])

    # c1 = f*c0 + i*g with c0 == 0  ->  i*g  (forget gate eliminated).
    h1 = o_g * jnp.tanh(i_g * g_g)                                    # (B, 128) f32
    # Offset-0 lane slice (no rotate) + bf16 cast -> native bf16xbf16->f32 MXU path.
    h1 = h1[:, :H].astype(jnp.bfloat16)                               # (B, H) bf16

    out_ref[...] = (jnp.dot(h1, w2_ref[...], preferred_element_type=jnp.float32)
                    + b2_ref[...])


def init_raw_params(key):
    """Deterministic synthetic parameters with the shapes nn.Module.__init__ implies."""
    C, H, F = NUMBER_CLASSES, LAYER_1_SIZE, FINAL_LAYER_SIZE
    ks = jax.random.split(key, 7)
    s = 0.1
    w1 = s * jax.random.normal(ks[0], (C, H), jnp.float32)        # linear1.weight^T
    b1 = s * jax.random.normal(ks[1], (1, H), jnp.float32)        # linear1.bias
    whh = s * jax.random.normal(ks[2], (4 * H, H), jnp.float32)   # rnn1.weight_hh_l0
    b_ih = s * jax.random.normal(ks[3], (4, H), jnp.float32)      # rnn1.bias_ih_l0 (reshaped)
    b_hh = s * jax.random.normal(ks[4], (4, H), jnp.float32)      # rnn1.bias_hh_l0 (reshaped)
    w2 = s * jax.random.normal(ks[5], (H, F), jnp.float32)        # linear2.weight^T
    b2 = s * jax.random.normal(ks[6], (1, F), jnp.float32)        # linear2.bias
    return dict(w1=w1, b1=b1, whh=whh, b_ih=b_ih, b_hh=b_hh, w2=w2, b2=b2)


def prepare_kernel_params(raw):
    """Offline weight prep: fold linear1 into the gate matmul, drop the forget gate,
    pad each live gate to its own 128-lane block, pad/cast linear2 weights."""
    H, GL = LAYER_1_SIZE, GATE_LANES
    w1, b1, whh = raw["w1"], raw["b1"], raw["whh"]
    bg = raw["b_ih"] + raw["b_hh"]                                 # (4, H), order i,f,g,o

    def fold_gate(gidx):
        w = whh[gidx * H:(gidx + 1) * H].T                         # (H, H)
        wf = w1 @ w                                                # (C, H)
        bf = b1 @ w + bg[gidx:gidx + 1]                            # (1, H)
        # Pad to a full 128-lane block -> vreg-aligned slices inside the kernel.
        return (jnp.pad(wf, ((0, 0), (0, GL - H))),
                jnp.pad(bf, ((0, 0), (0, GL - H))))

    (wi, bi), (wg_, bgg), (wo, bo) = fold_gate(0), fold_gate(2), fold_gate(3)
    w_fold = jnp.concatenate([wi, wg_, wo], axis=1)                # (C, 3*GL)
    b_fold = jnp.concatenate([bi, bgg, bo], axis=1)                # (1, 3*GL)

    pad = F_PAD - FINAL_LAYER_SIZE
    w2p = jnp.pad(raw["w2"], ((0, 0), (0, pad))).astype(jnp.bfloat16)   # (H, F_PAD) bf16
    b2p = jnp.pad(raw["b2"], ((0, 0), (0, pad)))                        # (1, F_PAD) f32
    return (w_fold, b_fold, w2p, b2p)


@jax.jit
def lstm_forward(x, y, kernel_params):
    """x: (B, number_classes) float32; y is unused (mirrors the PyTorch forward)."""
    del y
    w_fold, b_fold, w2p, b2p = kernel_params
    B, C = x.shape
    H = LAYER_1_SIZE
    GP = 3 * GATE_LANES
    grid = (F_PAD // TILE_F,)   # (1,) -> single step; no recomputation of the gate path

    bytes_accessed = (x.size * 4 + w_fold.size * 4 + b_fold.size * 4
                      + w2p.size * 2 + b2p.size * 4 + B * F_PAD * 4)

    out_pad = pl.pallas_call(
        lstm_decoder_kernel,
        out_shape=jax.ShapeDtypeStruct((B, F_PAD), jnp.float32),
        grid=grid,
        in_specs=[
            pl.BlockSpec((B, C), lambda j: (0, 0)),          # x (whole)
            pl.BlockSpec((C, GP), lambda j: (0, 0)),         # folded gate weights
            pl.BlockSpec((1, GP), lambda j: (0, 0)),         # folded gate bias
            pl.BlockSpec((H, TILE_F), lambda j: (0, j)),     # w2 tile (bf16)
            pl.BlockSpec((1, TILE_F), lambda j: (0, j)),     # b2 tile
        ],
        out_specs=pl.BlockSpec((B, TILE_F), lambda j: (0, j)),
        compiler_params=pltpu.CompilerParams(
            dimension_semantics=("parallel",)),
        cost_estimate=pl.CostEstimate(
            flops=2 * B * H * F_PAD + 2 * B * C * GP,
            transcendentals=4 * B * GATE_LANES,
            bytes_accessed=bytes_accessed),
    )(x, w_fold, b_fold, w2p, b2p)

    # unsqueeze(dim=1) carried through the forward + strip the 2048->2000 padding
    # (fused inside this jit; in production, keep the padded slab flowing downstream).
    return out_pad[:, None, :FINAL_LAYER_SIZE]


def reference_forward(x, raw, *, match_kernel_precision=False):
    """Pure-JAX reference of the PyTorch forward (number_of_layers == 2), unfused."""
    H = LAYER_1_SIZE
    w1, b1, whh = raw["w1"], raw["b1"], raw["whh"]
    bg = raw["b_ih"] + raw["b_hh"]
    w2, b2 = raw["w2"], raw["b2"]

    h0 = x @ w1 + b1
    i_g = jax.nn.sigmoid(h0 @ whh[0 * H:1 * H].T + bg[0])
    f_g = jax.nn.sigmoid(h0 @ whh[1 * H:2 * H].T + bg[1])
    g_g = jnp.tanh(h0 @ whh[2 * H:3 * H].T + bg[2])
    o_g = jax.nn.sigmoid(h0 @ whh[3 * H:4 * H].T + bg[3])
    c1 = f_g * 0.0 + i_g * g_g            # c0 == 0
    h1 = o_g * jnp.tanh(c1)
    if match_kernel_precision:
        # Mirror the kernel's bf16 storage of w2 and bf16 cast of h1 before the dot.
        h1 = h1.astype(jnp.bfloat16).astype(jnp.float32)
        w2 = w2.astype(jnp.bfloat16).astype(jnp.float32)
    out = jnp.dot(h1, w2, precision=jax.lax.Precision.HIGHEST) + b2
    return out[:, None, :]


if __name__ == "__main__":
    key = jax.random.PRNGKey(0)
    kx, ky, kp = jax.random.split(key, 3)

    x = jax.random.normal(kx, (BATCH, NUMBER_CLASSES), jnp.float32)
    y = jax.random.normal(ky, (BATCH,), jnp.float32)   # unused, mirrors forward(x, y)

    raw = init_raw_params(kp)
    kparams = prepare_kernel_params(raw)

    out = lstm_forward(x, y, kparams)
    out = jax.block_until_ready(out)
    assert out.shape == (BATCH, 1, FINAL_LAYER_SIZE), out.shape

    # Tight check vs a reference using the same bf16 quantization of w2 and h1 that
    # the kernel uses (validates the linear1 fold, gate order and forget elimination).
    ref_bf16 = reference_forward(x, raw, match_kernel_precision=True)
    assert jnp.allclose(out, ref_bf16, atol=2e-3, rtol=2e-3), "mismatch vs bf16-matched reference"

    # Loose check vs the original full-f32 weights: documents the (small) bf16
    # quantization delta of the stored linear2 weight and the bf16 h1 cast.
    ref_f32 = reference_forward(x, raw)
    assert jnp.allclose(out, ref_f32, atol=5e-3, rtol=5e-3), "mismatch vs f32 reference"

    print("KERNEL_OK")
</pallas_src>

<mosaic_0001>
module attributes {stable_mosaic.version = 11 : i64} {
  func.func @lstm_decoder_kernel(%arg0: i32, %arg1: memref<2x4xf32, #tpu.memory_space<vmem>>, %arg2: memref<4x384xf32, #tpu.memory_space<vmem>>, %arg3: memref<1x384xf32, #tpu.memory_space<vmem>>, %arg4: memref<32x2048xbf16, #tpu.memory_space<vmem>>, %arg5: memref<1x2048xf32, #tpu.memory_space<vmem>>, %arg6: memref<2x2048xf32, #tpu.memory_space<vmem>>) attributes {dimension_semantics = [#tpu.dimension_semantics<parallel>], iteration_bounds = array<i64: 1>, scalar_prefetch = 0 : i64, scratch_operands = 0 : i64, tpu.core_type = #tpu.core_type<tc>, window_params = [{pipeline_mode = #tpu.pipeline_mode<synchronous>, transform_indices = @transform_0, window_bounds = array<i64: 2, 4>}, {pipeline_mode = #tpu.pipeline_mode<synchronous>, transform_indices = @transform_1, window_bounds = array<i64: 4, 384>}, {pipeline_mode = #tpu.pipeline_mode<synchronous>, transform_indices = @transform_2, window_bounds = array<i64: 1, 384>}, {transform_indices = @transform_3, window_bounds = array<i64: 32, 2048>}, {transform_indices = @transform_4, window_bounds = array<i64: 1, 2048>}, {transform_indices = @transform_5, window_bounds = array<i64: 2, 2048>}]} {
    %c0 = arith.constant 0 : index
    %c0_0 = arith.constant 0 : index
    %0 = vector.load %arg1[%c0, %c0_0] : memref<2x4xf32, #tpu.memory_space<vmem>>, vector<2x4xf32>
    %c0_1 = arith.constant 0 : index
    %c0_2 = arith.constant 0 : index
    %1 = vector.load %arg2[%c0_1, %c0_2] : memref<4x384xf32, #tpu.memory_space<vmem>>, vector<4x384xf32>
    %cst = arith.constant dense<0.000000e+00> : vector<2x384xf32>
    %2 = tpu.matmul %0, %1, %cst {dimension_numbers = #tpu.dot_dimension_numbers<[1], [0], [0], [1], [0, 0, 1, 1], [], []>} : vector<2x4xf32>, vector<4x384xf32>, vector<2x384xf32> -> vector<2x384xf32>
    %c0_3 = arith.constant 0 : index
    %c0_4 = arith.constant 0 : index
    %3 = vector.load %arg3[%c0_3, %c0_4] : memref<1x384xf32, #tpu.memory_space<vmem>>, vector<1x384xf32>
    %4 = vector.broadcast %3 : vector<1x384xf32> to vector<2x384xf32>
    %5 = arith.addf %2, %4 : vector<2x384xf32>
    %6 = vector.extract_strided_slice %5 {offsets = [0, 0], sizes = [2, 128], strides = [1, 1]} : vector<2x384xf32> to vector<2x128xf32>
    %7 = arith.negf %6 : vector<2x128xf32>
    %8 = math.exp %7 : vector<2x128xf32>
    %cst_5 = arith.constant 1.000000e+00 : f32
    %9 = vector.broadcast %cst_5 : f32 to vector<2x128xf32>
    %10 = arith.addf %9, %8 : vector<2x128xf32>
    %11 = arith.divf %9, %10 : vector<2x128xf32>
    %12 = vector.extract_strided_slice %5 {offsets = [0, 128], sizes = [2, 128], strides = [1, 1]} : vector<2x384xf32> to vector<2x128xf32>
    %13 = math.tanh %12 : vector<2x128xf32>
    %14 = vector.extract_strided_slice %5 {offsets = [0, 256], sizes = [2, 128], strides = [1, 1]} : vector<2x384xf32> to vector<2x128xf32>
    %15 = arith.negf %14 : vector<2x128xf32>
    %16 = math.exp %15 : vector<2x128xf32>
    %cst_6 = arith.constant 1.000000e+00 : f32
    %17 = vector.broadcast %cst_6 : f32 to vector<2x128xf32>
    %18 = arith.addf %17, %16 : vector<2x128xf32>
    %19 = arith.divf %17, %18 : vector<2x128xf32>
    %20 = arith.mulf %11, %13 : vector<2x128xf32>
    %21 = math.tanh %20 : vector<2x128xf32>
    %22 = arith.mulf %19, %21 : vector<2x128xf32>
    %23 = vector.extract_strided_slice %22 {offsets = [0, 0], sizes = [2, 32], strides = [1, 1]} : vector<2x128xf32> to vector<2x32xf32>
    %24 = arith.truncf %23 : vector<2x32xf32> to vector<2x32xbf16>
    %c0_7 = arith.constant 0 : index
    %c0_8 = arith.constant 0 : index
    %25 = vector.load %arg4[%c0_7, %c0_8] : memref<32x2048xbf16, #tpu.memory_space<vmem>>, vector<32x2048xbf16>
    %cst_9 = arith.constant dense<0.000000e+00> : vector<2x2048xf32>
    %26 = tpu.matmul %24, %25, %cst_9 {dimension_numbers = #tpu.dot_dimension_numbers<[1], [0], [0], [1], [0, 0, 1, 1], [], []>} : vector<2x32xbf16>, vector<32x2048xbf16>, vector<2x2048xf32> -> vector<2x2048xf32>
    %c0_10 = arith.constant 0 : index
    %c0_11 = arith.constant 0 : index
    %27 = vector.load %arg5[%c0_10, %c0_11] : memref<1x2048xf32, #tpu.memory_space<vmem>>, vector<1x2048xf32>
    %28 = vector.broadcast %27 : vector<1x2048xf32> to vector<2x2048xf32>
    %29 = arith.addf %26, %28 : vector<2x2048xf32>
    %c0_12 = arith.constant 0 : index
    %c0_13 = arith.constant 0 : index
    %30 = vector.load %arg6[%c0_12, %c0_13] : memref<2x2048xf32, #tpu.memory_space<vmem>>, vector<2x2048xf32>
    tpu.vector_store %arg6[%c0_12, %c0_13], %29 {strides = array<i32>} : memref<2x2048xf32, #tpu.memory_space<vmem>>, vector<2x2048xf32>,
    return
  }
  func.func @transform_0(%arg0: i32) -> (i32, i32) {
    %c0_i32 = arith.constant 0 : i32
    %c0_i32_0 = arith.constant 0 : i32
    %c0_i32_1 = arith.constant 0 : i32
    return %c0_i32, %c0_i32_0 : i32, i32
  }
  func.func @transform_1(%arg0: i32) -> (i32, i32) {
    %c0_i32 = arith.constant 0 : i32
    %c0_i32_0 = arith.constant 0 : i32
    %c0_i32_1 = arith.constant 0 : i32
    return %c0_i32, %c0_i32_0 : i32, i32
  }
  func.func @transform_2(%arg0: i32) -> (i32, i32) {
    %c0_i32 = arith.constant 0 : i32
    %c0_i32_0 = arith.constant 0 : i32
    %c0_i32_1 = arith.constant 0 : i32
    return %c0_i32, %c0_i32_0 : i32, i32
  }
  func.func @transform_3(%arg0: i32) -> (i32, i32) {
    %c0_i32 = arith.constant 0 : i32
    %c0_i32_0 = arith.constant 0 : i32
    return %c0_i32, %arg0 : i32, i32
  }
  func.func @transform_4(%arg0: i32) -> (i32, i32) {
    %c0_i32 = arith.constant 0 : i32
    %c0_i32_0 = arith.constant 0 : i32
    return %c0_i32, %arg0 : i32, i32
  }
  func.func @transform_5(%arg0: i32) -> (i32, i32) {
    %c0_i32 = arith.constant 0 : i32
    %c0_i32_0 = arith.constant 0 : i32
    return %c0_i32, %arg0 : i32, i32
  }
}

</mosaic_0001>

<llo_original>
// kernel: lstm_forward.1
$region0: #{lstm_forward.1}
  #allocation0 [shape = 'u32[]', space=smem, size = 0x4, offset = 0x4, fixed_abs, tag = 'smem constant byte address 0x4 - core index']
  #allocation1 [shape = 'u32[144,128]{1,0:T(1,128)}', space=vmem, size = 0x12000, scoped, tag = 'internal scratch']
  %s0 = inlined_call_operand.hbm [shape: f32[2,4], index: 0, kind: input, shape index: {}]
  %s1 = inlined_call_operand.hbm [shape: f32[4,384], index: 1, kind: input, shape index: {}]
  %s2 = inlined_call_operand.vmem [shape: f32[1,384], index: 2, kind: input, shape index: {}]
  %s3 = inlined_call_operand.hbm [shape: bf16[32,2048], index: 3, kind: input, shape index: {}]
  %s4 = inlined_call_operand.hbm [shape: f32[1,2048], index: 4, kind: input, shape index: {}]
  %s5 = inlined_call_operand.vmem [shape: f32[2,2048], index: 5, kind: output, shape index: {}]
  %s6 = sld [smem:[#allocation0]]
  $region46: #{lstm_forward.1} parent=0
    _
  %s8 = ssub.s32 1, %s6
  %s9 = scalar_select 0, %s8, %s6
  $region1: #{lstm_forward.1} parent=0
    #allocation2 [shape = 'u8[1024]{0}', space=vmem, size = 0x400, scoped, tag = 'input window, operand 0, single buffered']
    #allocation3 [shape = 's32[1]{0}', space=sflag, size = 0x4, scoped, tag = 'scoped memory for lstm_forward.1']
    #allocation4 [shape = 'u8[6144]{0}', space=vmem, size = 0x1800, scoped, tag = 'input window, operand 1, single buffered']
    #allocation5 [shape = 's32[1]{0}', space=sflag, size = 0x4, scoped, tag = 'scoped memory for lstm_forward.1']
    #allocation6 [shape = 'u8[131072]{0}', space=vmem, size = 0x20000, scoped, tag = 'input window, operand 3, single buffered']
    #allocation7 [shape = 'u8[8192]{0}', space=vmem, size = 0x2000, scoped, tag = 'input window, operand 4, single buffered']
    #allocation8 [shape = 's32[1]{0}', space=sflag, size = 0x4, scoped, tag = 'scoped memory for lstm_forward.1']
    %10 = vsyncpa [#allocation3], 0
    %11 = vsyncpa [#allocation5], 0
    %12 = vsyncpa [#allocation8], 0
    // Predicated region
    $region2: #{lstm_forward.1} parent=1 // pred_check
      _
    $region3: #{lstm_forward.1} parent=1 // pred_check_branch
      %14 = sbr.rel (0) target = $region5
    $region4: #{lstm_forward.1} parent=1 // pred_region
      %s16 = ssub.s32 32, 32
      %17 = vsyncadd [#allocation3], %s16
      %s19 = sshll.u32 [#allocation2], 4
      %s20 = int_to_ptr.vmem [resolvable:$true] %s19
      %22 = dma.hbm_to_vmem [thread:$0]  %s0, 32, %s20, [#allocation3]
    $region5: #{lstm_forward.1} parent=1 // pred_fallthru
      _
    // Predicated region
    $region6: #{lstm_forward.1} parent=1 // pred_check
      _
    $region7: #{lstm_forward.1} parent=1 // pred_check_branch
      %24 = sbr.rel (0) target = $region9
    $region8: #{lstm_forward.1} parent=1 // pred_region
      %s26 = ssub.s32 192, 192
      %27 = vsyncadd [#allocation5], %s26
      %s29 = sshll.u32 [#allocation4], 4
      %s30 = int_to_ptr.vmem [resolvable:$true] %s29
      %32 = dma.hbm_to_vmem [thread:$0]  %s1, 192, %s30, [#allocation5]
    $region9: #{lstm_forward.1} parent=1 // pred_fallthru
      _
    // Predicated region
    $region10: #{lstm_forward.1} parent=1 // pred_check
      _
    $region11: #{lstm_forward.1} parent=1 // pred_check_branch
      %34 = sbr.rel (0) target = $region13
    $region12: #{lstm_forward.1} parent=1 // pred_region
      _
    $region13: #{lstm_forward.1} parent=1 // pred_fallthru
      _
    // Predicated region
    $region14: #{lstm_forward.1} parent=1 // pred_check
      _
    $region15: #{lstm_forward.1} parent=1 // pred_check_branch
      %36 = sbr.rel (0) target = $region17
    $region16: #{lstm_forward.1} parent=1 // pred_region
      %s38 = ssub.s32 4096, 4096
      %39 = vsyncadd [#allocation5], %s38
      %s40 = sshll.u32 [#allocation6], 4
      %s41 = int_to_ptr.vmem [resolvable:$true] %s40
      %46 = dma.hbm_to_vmem [thread:$0]  %s3, 4096, %s41, [#allocation5], 1024, 1024, 64
    $region17: #{lstm_forward.1} parent=1 // pred_fallthru
      _
    // Predicated region
    $region18: #{lstm_forward.1} parent=1 // pred_check
      _
    $region19: #{lstm_forward.1} parent=1 // pred_check_branch
      %48 = sbr.rel (0) target = $region21
    $region20: #{lstm_forward.1} parent=1 // pred_region
      %s50 = ssub.s32 256, 256
      %51 = vsyncadd [#allocation8], %s50
      %s53 = sshll.u32 [#allocation7], 4
      %s54 = int_to_ptr.vmem [resolvable:$true] %s53
      %56 = dma.hbm_to_vmem [thread:$0]  %s4, 256, %s54, [#allocation8]
    $region21: #{lstm_forward.1} parent=1 // pred_fallthru
      _
    // Predicated region
    $region22: #{lstm_forward.1} parent=1 // pred_check
      _
    $region23: #{lstm_forward.1} parent=1 // pred_check_branch
      %58 = sbr.rel (0) target = $region25
    $region24: #{lstm_forward.1} parent=1 // pred_region
      %59 = dma.done [#allocation3], 32
    $region25: #{lstm_forward.1} parent=1 // pred_fallthru
      _
    // Predicated region
    $region26: #{lstm_forward.1} parent=1 // pred_check
      _
    $region27: #{lstm_forward.1} parent=1 // pred_check_branch
      %61 = sbr.rel (0) target = $region29
    $region28: #{lstm_forward.1} parent=1 // pred_region
      %62 = dma.done [#allocation5], 192
    $region29: #{lstm_forward.1} parent=1 // pred_fallthru
      _
    // Predicated region
    $region30: #{lstm_forward.1} parent=1 // pred_check
      _
    $region31: #{lstm_forward.1} parent=1 // pred_check_branch
      %64 = sbr.rel (0) target = $region33
    $region32: #{lstm_forward.1} parent=1 // pred_region
      %65 = dma.done [#allocation5], 4096
    $region33: #{lstm_forward.1} parent=1 // pred_fallthru
      _
    // Predicated region
    $region34: #{lstm_forward.1} parent=1 // pred_check
      _
    $region35: #{lstm_forward.1} parent=1 // pred_check_branch
      %67 = sbr.rel (0) target = $region37
    $region36: #{lstm_forward.1} parent=1 // pred_region
      %68 = dma.done [#allocation8], 256
    $region37: #{lstm_forward.1} parent=1 // pred_fallthru
      _
    %v70 = vld [vmem:[#allocation2] sm:$0x3]
    %v71 = vld [vmem:[#allocation4] sm:$0xff]
    %v72 = vld [vmem:[#allocation4 + $0x8] sm:$0xf]
    %v73 = vld [vmem:[%s2] sm:$0x7]
    %v75 = vlaneseq
    %v76 = vshrl.u32 %v75, 7
    %v77 = vsub.s32 0, %v76
    %v78 = vrot.slane %v73, %v77
    %v79 = vlaneseq
    %v80 = vshrl.u32 %v79, 7
    %v81 = vsub.s32 1, %v80
    %v82 = vrot.slane %v73, %v81
    %v83 = vlaneseq
    %v84 = vshrl.u32 %v83, 7
    %v85 = vsub.s32 2, %v84
    %v86 = vrot.slane %v73, %v85
    %v92 = vcombine.high %v71, %v71
    %vm93 = vcmask 31744
    %v95 = vsel %vm93, %v70, 0
    %vm97 = vcmask 1043456
    %v98 = vsel %vm97, %v71, 0
    %v100 = vsel %vm97, %v92, 0
    %v102 = vsel %vm97, %v72, 0
    %104 = vmatprep.subr.mxu0 %v100
    %105 = vmatpush1.msra.mxu0 %v98
    %106 = vmatprep.subr.mxu0 0.0
    %107 = vmatpush1.msra.mxu0 0.0
    %108 = vmatprep.subr.mxu0 0.0
    %109 = vmatpush1.msra.mxu0 0.0
    %110 = vmatprep.subr.mxu0 0.0
    %111 = vmatpush1.msra.mxu0 0.0
    %112 = vmatprep.subr.mxu0 0.0
    %113 = vmatpush1.msra.mxu0 0.0
    %114 = vmatprep.subr.mxu0 0.0
    %115 = vmatpush1.msra.mxu0 0.0
    %116 = vmatprep.subr.mxu0 0.0
    %117 = vmatpush1.msra.mxu0 0.0
    %118 = vmatprep.subr.mxu0 0.0
    %119 = vmatpush1.msra.mxu0 0.0
    %120 = vmatprep.subr.mxu0 0.0
    %121 = vmatpush1.msra.mxu0 0.0
    %122 = vmatprep.subr.mxu0 0.0
    %123 = vmatpush1.msra.mxu0 0.0
    %124 = vmatprep.subr.mxu0 0.0
    %125 = vmatpush1.msra.mxu0 0.0
    %126 = vmatprep.subr.mxu0 0.0
    %127 = vmatpush1.msra.mxu0 0.0
    %128 = vmatprep.subr.mxu0 0.0
    %129 = vmatpush1.msra.mxu0 0.0
    %130 = vmatprep.subr.mxu0 0.0
    %131 = vmatpush1.msra.mxu0 0.0
    %132 = vmatprep.subr.mxu0 0.0
    %133 = vmatpush1.msra.mxu0 0.0
    %134 = vmatprep.subr.mxu0 0.0
    %135 = vmatpush1.msra.mxu0 0.0
    %136 = vmatprep.subr.mxu0 0.0
    %137 = vmatpush1.msra.mxu0 0.0
    %138 = vmatprep.subr.mxu0 0.0
    %139 = vmatpush1.msra.mxu0 0.0
    %140 = vmatprep.subr.mxu0 0.0
    %141 = vmatpush1.msra.mxu0 0.0
    %142 = vmatprep.subr.mxu0 0.0
    %143 = vmatpush1.msra.mxu0 0.0
    %144 = vmatprep.subr.mxu0 0.0
    %145 = vmatpush1.msra.mxu0 0.0
    %146 = vmatprep.subr.mxu0 0.0
    %147 = vmatpush1.msra.mxu0 0.0
    %148 = vmatprep.subr.mxu0 0.0
    %149 = vmatpush1.msra.mxu0 0.0
    %150 = vmatprep.subr.mxu0 0.0
    %151 = vmatpush1.msra.mxu0 0.0
    %152 = vmatprep.subr.mxu0 0.0
    %153 = vmatpush1.msra.mxu0 0.0
    %154 = vmatprep.subr.mxu0 0.0
    %155 = vmatpush1.msra.mxu0 0.0
    %156 = vmatprep.subr.mxu0 0.0
    %157 = vmatpush1.msra.mxu0 0.0
    %158 = vmatprep.subr.mxu0 0.0
    %159 = vmatpush1.msra.mxu0 0.0
    %160 = vmatprep.subr.mxu0 0.0
    %161 = vmatpush1.msra.mxu0 0.0
    %162 = vmatprep.subr.mxu0 0.0
    %163 = vmatpush1.msra.mxu0 0.0
    %164 = vmatprep.subr.mxu0 0.0
    %165 = vmatpush1.msra.mxu0 0.0
    %166 = vmatprep.subr.mxu0 0.0
    %167 = vmatpush1.msra.mxu0 0.0
    %168 = vmatprep.mubr.f32.mxu0 0.0
    %169 = vmatmul.mubr.f32.gmra.mrb[0].mxu0 %v95
    %v170 = vpop.f32.mrb[0].mxu0
    %v171 = vadd.f32 %v78, %v170
    %v172 = vpop.f32.mrb[0].mxu0
    %v173 = vadd.f32 %v82, %v172
    %174 = vdwg.mxu0
    %175 = vmatprep.subr.mxu0 0.0
    %176 = vmatpush1.msra.mxu0 %v102
    %177 = vmatprep.subr.mxu0 0.0
    %178 = vmatpush1.msra.mxu0 0.0
    %179 = vmatprep.subr.mxu0 0.0
    %180 = vmatpush1.msra.mxu0 0.0
    %181 = vmatprep.subr.mxu0 0.0
    %182 = vmatpush1.msra.mxu0 0.0
    %183 = vmatprep.subr.mxu0 0.0
    %184 = vmatpush1.msra.mxu0 0.0
    %185 = vmatprep.subr.mxu0 0.0
    %186 = vmatpush1.msra.mxu0 0.0
    %187 = vmatprep.subr.mxu0 0.0
    %188 = vmatpush1.msra.mxu0 0.0
    %189 = vmatprep.subr.mxu0 0.0
    %190 = vmatpush1.msra.mxu0 0.0
    %191 = vmatprep.subr.mxu0 0.0
    %192 = vmatpush1.msra.mxu0 0.0
    %193 = vmatprep.subr.mxu0 0.0
    %194 = vmatpush1.msra.mxu0 0.0
    %195 = vmatprep.subr.mxu0 0.0
    %196 = vmatpush1.msra.mxu0 0.0
    %197 = vmatprep.subr.mxu0 0.0
    %198 = vmatpush1.msra.mxu0 0.0
    %199 = vmatprep.subr.mxu0 0.0
    %200 = vmatpush1.msra.mxu0 0.0
    %201 = vmatprep.subr.mxu0 0.0
    %202 = vmatpush1.msra.mxu0 0.0
    %203 = vmatprep.subr.mxu0 0.0
    %204 = vmatpush1.msra.mxu0 0.0
    %205 = vmatprep.subr.mxu0 0.0
    %206 = vmatpush1.msra.mxu0 0.0
    %207 = vmatprep.subr.mxu0 0.0
    %208 = vmatpush1.msra.mxu0 0.0
    %209 = vmatprep.subr.mxu0 0.0
    %210 = vmatpush1.msra.mxu0 0.0
    %211 = vmatprep.subr.mxu0 0.0
    %212 = vmatpush1.msra.mxu0 0.0
    %213 = vmatprep.subr.mxu0 0.0
    %214 = vmatpush1.msra.mxu0 0.0
    %215 = vmatprep.subr.mxu0 0.0
    %216 = vmatpush1.msra.mxu0 0.0
    %217 = vmatprep.subr.mxu0 0.0
    %218 = vmatpush1.msra.mxu0 0.0
    %219 = vmatprep.subr.mxu0 0.0
    %220 = vmatpush1.msra.mxu0 0.0
    %221 = vmatprep.subr.mxu0 0.0
    %222 = vmatpush1.msra.mxu0 0.0
    %223 = vmatprep.subr.mxu0 0.0
    %224 = vmatpush1.msra.mxu0 0.0
    %225 = vmatprep.subr.mxu0 0.0
    %226 = vmatpush1.msra.mxu0 0.0
    %227 = vmatprep.subr.mxu0 0.0
    %228 = vmatpush1.msra.mxu0 0.0
    %229 = vmatprep.subr.mxu0 0.0
    %230 = vmatpush1.msra.mxu0 0.0
    %231 = vmatprep.subr.mxu0 0.0
    %232 = vmatpush1.msra.mxu0 0.0
    %233 = vmatprep.subr.mxu0 0.0
    %234 = vmatpush1.msra.mxu0 0.0
    %235 = vmatprep.subr.mxu0 0.0
    %236 = vmatpush1.msra.mxu0 0.0
    %237 = vmatprep.subr.mxu0 0.0
    %238 = vmatpush1.msra.mxu0 0.0
    %239 = vmatprep.mubr.f32.mxu0 0.0
    %240 = vmatmul.mubr.f32.gmra.mrb[0].mxu0 %v95
    %v241 = vpop.f32.mrb[0].mxu0
    %v242 = vadd.f32 %v86, %v241
    %v243 = vpop.f32.mrb[0].mxu0
    %244 = vdwg.mxu0
    %v245 = vxor.u32 %v171, 2147483648
    %v246 = vmul.f32 %v245, 1.442695
    %v247 = vpow.pop %v246
    %v248 = vadd.f32 %v247, 1.0
    %v249 = vrcp.pop %v248
    %v250 = vmul.f32 1.0, %v249
    %v251 = vtanh.pop %v173
    %v252 = vxor.u32 %v242, 2147483648
    %v253 = vmul.f32 %v252, 1.442695
    %v254 = vpow.pop %v253
    %v255 = vadd.f32 %v254, 1.0
    %v256 = vrcp.pop %v255
    %v257 = vmul.f32 1.0, %v256
    %v258 = vmul.f32 %v250, %v251
    %v259 = vtanh.pop %v258
    %v260 = vmul.f32 %v257, %v259
    %v261 = vpack.c.bf16 %v260, %v260
    %v262 = vld [vmem:[#allocation6] sm:$0xff]
    %v263 = vld [vmem:[#allocation6 + $0x8] sm:$0xff]
    %v264 = vld [vmem:[#allocation6 + $0x10] sm:$0xff]
    %v265 = vld [vmem:[#allocation6 + $0x18] sm:$0xff]
    %v266 = vld [vmem:[#allocation6 + $0x20] sm:$0xff]
    %v267 = vld [vmem:[#allocation6 + $0x28] sm:$0xff]
    %v268 = vld [vmem:[#allocation6 + $0x30] sm:$0xff]
    %v269 = vld [vmem:[#allocation6 + $0x38] sm:$0xff]
    %v270 = vld [vmem:[#allocation6 + $0x40] sm:$0xff]
    %v271 = vld [vmem:[#allocation6 + $0x48] sm:$0xff]
    %v272 = vld [vmem:[#allocation6 + $0x50] sm:$0xff]
    %v273 = vld [vmem:[#allocation6 + $0x58] sm:$0xff]
    %v274 = vld [vmem:[#allocation6 + $0x60] sm:$0xff]
    %v275 = vld [vmem:[#allocation6 + $0x68] sm:$0xff]
    %v276 = vld [vmem:[#allocation6 + $0x70] sm:$0xff]
    %v277 = vld [vmem:[#allocation6 + $0x78] sm:$0xff]
    %v278 = vld [vmem:[#allocation6 + $0x80] sm:$0xff]
    %v279 = vld [vmem:[#allocation6 + $0x88] sm:$0xff]
    %v280 = vld [vmem:[#allocation6 + $0x90] sm:$0xff]
    %v281 = vld [vmem:[#allocation6 + $0x98] sm:$0xff]
    %v282 = vld [vmem:[#allocation6 + $0xa0] sm:$0xff]
    %v283 = vld [vmem:[#allocation6 + $0xa8] sm:$0xff]
    %v284 = vld [vmem:[#allocation6 + $0xb0] sm:$0xff]
    %v285 = vld [vmem:[#allocation6 + $0xb8] sm:$0xff]
    %v286 = vld [vmem:[#allocation6 + $0xc0] sm:$0xff]
    %v287 = vld [vmem:[#allocation6 + $0xc8] sm:$0xff]
    %v288 = vld [vmem:[#allocation6 + $0xd0] sm:$0xff]
    %v289 = vld [vmem:[#allocation6 + $0xd8] sm:$0xff]
    %v290 = vld [vmem:[#allocation6 + $0xe0] sm:$0xff]
    %v291 = vld [vmem:[#allocation6 + $0xe8] sm:$0xff]
    %v292 = vld [vmem:[#allocation6 + $0xf0] sm:$0xff]
    %v293 = vld [vmem:[#allocation6 + $0xf8] sm:$0xff]
    %v294 = vld [vmem:[#allocation7] sm:$0xff]
    %v295 = vld [vmem:[#allocation7 + $0x8] sm:$0xff]
    %v298 = vlaneseq
    %v299 = vshrl.u32 %v298, 7
    %v300 = vsub.s32 0, %v299
    %v301 = vrot.slane %v294, %v300
    %v302 = vlaneseq
    %v303 = vshrl.u32 %v302, 7
    %v304 = vsub.s32 1, %v303
    %v305 = vrot.slane %v294, %v304
    %v306 = vlaneseq
    %v307 = vshrl.u32 %v306, 7
    %v308 = vsub.s32 2, %v307
    %v309 = vrot.slane %v294, %v308
    %v310 = vlaneseq
    %v311 = vshrl.u32 %v310, 7
    %v312 = vsub.s32 3, %v311
    %v313 = vrot.slane %v294, %v312
    %v314 = vlaneseq
    %v315 = vshrl.u32 %v314, 7
    %v316 = vsub.s32 4, %v315
    %v317 = vrot.slane %v294, %v316
    %v318 = vlaneseq
    %v319 = vshrl.u32 %v318, 7
    %v320 = vsub.s32 5, %v319
    %v321 = vrot.slane %v294, %v320
    %v322 = vlaneseq
    %v323 = vshrl.u32 %v322, 7
    %v324 = vsub.s32 6, %v323
    %v325 = vrot.slane %v294, %v324
    %v326 = vlaneseq
    %v327 = vshrl.u32 %v326, 7
    %v328 = vsub.s32 7, %v327
    %v329 = vrot.slane %v294, %v328
    %v330 = vlaneseq
    %v331 = vshrl.u32 %v330, 7
    %v332 = vsub.s32 0, %v331
    %v333 = vrot.slane %v295, %v332
    %v334 = vlaneseq
    %v335 = vshrl.u32 %v334, 7
    %v336 = vsub.s32 1, %v335
    %v337 = vrot.slane %v295, %v336
    %v338 = vlaneseq
    %v339 = vshrl.u32 %v338, 7
    %v340 = vsub.s32 2, %v339
    %v341 = vrot.slane %v295, %v340
    %v342 = vlaneseq
    %v343 = vshrl.u32 %v342, 7
    %v344 = vsub.s32 3, %v343
    %v345 = vrot.slane %v295, %v344
    %v346 = vlaneseq
    %v347 = vshrl.u32 %v346, 7
    %v348 = vsub.s32 4, %v347
    %v349 = vrot.slane %v295, %v348
    %v350 = vlaneseq
    %v351 = vshrl.u32 %v350, 7
    %v352 = vsub.s32 5, %v351
    %v353 = vrot.slane %v295, %v352
    %v354 = vlaneseq
    %v355 = vshrl.u32 %v354, 7
    %v356 = vsub.s32 6, %v355
    %v357 = vrot.slane %v295, %v356
    %v358 = vlaneseq
    %v359 = vshrl.u32 %v358, 7
    %v360 = vsub.s32 7, %v359
    %v361 = vrot.slane %v295, %v360
    %v410 = vunpack.c.l.b16 %v262
    %v411 = vunpack.c.h.b16 %v262
    %v412 = vunpack.c.l.b16 %v263
    %v413 = vunpack.c.h.b16 %v263
    %v414 = vunpack.c.l.b16 %v264
    %v415 = vunpack.c.h.b16 %v264
    %v416 = vunpack.c.l.b16 %v265
    %v417 = vunpack.c.h.b16 %v265
    %v418 = vunpack.c.l.b16 %v266
    %v419 = vunpack.c.h.b16 %v266
    %v420 = vunpack.c.l.b16 %v267
    %v421 = vunpack.c.h.b16 %v267
    %v422 = vunpack.c.l.b16 %v268
    %v423 = vunpack.c.h.b16 %v268
    %v424 = vunpack.c.l.b16 %v269
    %v425 = vunpack.c.h.b16 %v269
    %v426 = vunpack.c.l.b16 %v270
    %v427 = vunpack.c.h.b16 %v270
    %v428 = vunpack.c.l.b16 %v271
    %v429 = vunpack.c.h.b16 %v271
    %v430 = vunpack.c.l.b16 %v272
    %v431 = vunpack.c.h.b16 %v272
    %v432 = vunpack.c.l.b16 %v273
    %v433 = vunpack.c.h.b16 %v273
    %v434 = vunpack.c.l.b16 %v274
    %v435 = vunpack.c.h.b16 %v274
    %v436 = vunpack.c.l.b16 %v275
    %v437 = vunpack.c.h.b16 %v275
    %v438 = vunpack.c.l.b16 %v276
    %v439 = vunpack.c.h.b16 %v276
    %v440 = vunpack.c.l.b16 %v277
    %v441 = vunpack.c.h.b16 %v277
    %v442 = vunpack.c.l.b16 %v278
    %v443 = vunpack.c.h.b16 %v278
    %v444 = vunpack.c.l.b16 %v279
    %v445 = vunpack.c.h.b16 %v279
    %v446 = vunpack.c.l.b16 %v280
    %v447 = vunpack.c.h.b16 %v280
    %v448 = vunpack.c.l.b16 %v281
    %v449 = vunpack.c.h.b16 %v281
    %v450 = vunpack.c.l.b16 %v282
    %v451 = vunpack.c.h.b16 %v282
    %v452 = vunpack.c.l.b16 %v283
    %v453 = vunpack.c.h.b16 %v283
    %v454 = vunpack.c.l.b16 %v284
    %v455 = vunpack.c.h.b16 %v284
    %v456 = vunpack.c.l.b16 %v285
    %v457 = vunpack.c.h.b16 %v285
    %v458 = vunpack.c.l.b16 %v286
    %v459 = vunpack.c.h.b16 %v286
    %v460 = vunpack.c.l.b16 %v287
    %v461 = vunpack.c.h.b16 %v287
    %v462 = vunpack.c.l.b16 %v288
    %v463 = vunpack.c.h.b16 %v288
    %v464 = vunpack.c.l.b16 %v289
    %v465 = vunpack.c.h.b16 %v289
    %v466 = vunpack.c.l.b16 %v290
    %v467 = vunpack.c.h.b16 %v290
    %v468 = vunpack.c.l.b16 %v291
    %v469 = vunpack.c.h.b16 %v291
    %v470 = vunpack.c.l.b16 %v292
    %v471 = vunpack.c.h.b16 %v292
    %v472 = vunpack.c.l.b16 %v293
    %v473 = vunpack.c.h.b16 %v293
    %v474 = vpack.c.b16 %v426, %v410
    %v475 = vpack.c.b16 %v427, %v411
    %v476 = vpack.c.b16 %v428, %v412
    %v477 = vpack.c.b16 %v429, %v413
    %v478 = vpack.c.b16 %v430, %v414
    %v479 = vpack.c.b16 %v431, %v415
    %v480 = vpack.c.b16 %v432, %v416
    %v481 = vpack.c.b16 %v433, %v417
    %v482 = vpack.c.b16 %v434, %v418
    %v483 = vpack.c.b16 %v435, %v419
    %v484 = vpack.c.b16 %v436, %v420
    %v485 = vpack.c.b16 %v437, %v421
    %v486 = vpack.c.b16 %v438, %v422
    %v487 = vpack.c.b16 %v439, %v423
    %v488 = vpack.c.b16 %v440, %v424
    %v489 = vpack.c.b16 %v441, %v425
    %v490 = vpack.c.b16 %v458, %v442
    %v491 = vpack.c.b16 %v459, %v443
    %v492 = vpack.c.b16 %v460, %v444
    %v493 = vpack.c.b16 %v461, %v445
    %v494 = vpack.c.b16 %v462, %v446
    %v495 = vpack.c.b16 %v463, %v447
    %v496 = vpack.c.b16 %v464, %v448
    %v497 = vpack.c.b16 %v465, %v449
    %v498 = vpack.c.b16 %v466, %v450
    %v499 = vpack.c.b16 %v467, %v451
    %v500 = vpack.c.b16 %v468, %v452
    %v501 = vpack.c.b16 %v469, %v453
    %v502 = vpack.c.b16 %v470, %v454
    %v503 = vpack.c.b16 %v471, %v455
    %v504 = vpack.c.b16 %v472, %v456
    %v505 = vpack.c.b16 %v473, %v457
    %vm538 = vcmask 261120
    %v540 = vsel %vm538, %v261, 0
    %542 = vmatprep.subr.bf16.mxu0 %v475
    %543 = vmatpush1.bf16.msra.mxu0 %v474
    %544 = vmatprep.subr.bf16.mxu0 %v491
    %545 = vmatpush1.bf16.msra.mxu0 %v490
    %546 = vmatprep.subr.bf16.mxu0 0
    %547 = vmatpush1.bf16.msra.mxu0 0
    %548 = vmatprep.subr.bf16.mxu0 0
    %549 = vmatpush1.bf16.msra.mxu0 0
    %550 = vmatprep.subr.bf16.mxu0 0
    %551 = vmatpush1.bf16.msra.mxu0 0
    %552 = vmatprep.subr.bf16.mxu0 0
    %553 = vmatpush1.bf16.msra.mxu0 0
    %554 = vmatprep.subr.bf16.mxu0 0
    %555 = vmatpush1.bf16.msra.mxu0 0
    %556 = vmatprep.subr.bf16.mxu0 0
    %557 = vmatpush1.bf16.msra.mxu0 0
    %558 = vmatprep.subr.bf16.mxu0 0
    %559 = vmatpush1.bf16.msra.mxu0 0
    %560 = vmatprep.subr.bf16.mxu0 0
    %561 = vmatpush1.bf16.msra.mxu0 0
    %562 = vmatprep.subr.bf16.mxu0 0
    %563 = vmatpush1.bf16.msra.mxu0 0
    %564 = vmatprep.subr.bf16.mxu0 0
    %565 = vmatpush1.bf16.msra.mxu0 0
    %566 = vmatprep.subr.bf16.mxu0 0
    %567 = vmatpush1.bf16.msra.mxu0 0
    %568 = vmatprep.subr.bf16.mxu0 0
    %569 = vmatpush1.bf16.msra.mxu0 0
    %570 = vmatprep.subr.bf16.mxu0 0
    %571 = vmatpush1.bf16.msra.mxu0 0
    %572 = vmatprep.subr.bf16.mxu0 0
    %573 = vmatpush1.bf16.msra.mxu0 0
    %574 = vmatprep.mubr.bf16.mxu0 0
    %575 = vmatmul.mubr.bf16.gmra.mrb[0].mxu0 %v540
    %v576 = vpop.f32.mrb[0].mxu0
    %v577 = vadd.f32 %v301, %v576
    %v578 = vpop.f32.mrb[0].mxu0
    %v579 = vadd.f32 %v305, %v578
    %v580 = vpop.f32.mrb[0].mxu0
    %v581 = vpop.f32.mrb[0].mxu0
    %582 = vdwg.mxu0
    %583 = vmatprep.subr.bf16.mxu0 %v477
    %584 = vmatpush1.bf16.msra.mxu0 %v476
    %585 = vmatprep.subr.bf16.mxu0 %v493
    %586 = vmatpush1.bf16.msra.mxu0 %v492
    %587 = vmatprep.subr.bf16.mxu0 0
    %588 = vmatpush1.bf16.msra.mxu0 0
    %589 = vmatprep.subr.bf16.mxu0 0
    %590 = vmatpush1.bf16.msra.mxu0 0
    %591 = vmatprep.subr.bf16.mxu0 0
    %592 = vmatpush1.bf16.msra.mxu0 0
    %593 = vmatprep.subr.bf16.mxu0 0
    %594 = vmatpush1.bf16.msra.mxu0 0
    %595 = vmatprep.subr.bf16.mxu0 0
    %596 = vmatpush1.bf16.msra.mxu0 0
    %597 = vmatprep.subr.bf16.mxu0 0
    %598 = vmatpush1.bf16.msra.mxu0 0
    %599 = vmatprep.subr.bf16.mxu0 0
    %600 = vmatpush1.bf16.msra.mxu0 0
    %601 = vmatprep.subr.bf16.mxu0 0
    %602 = vmatpush1.bf16.msra.mxu0 0
    %603 = vmatprep.subr.bf16.mxu0 0
    %604 = vmatpush1.bf16.msra.mxu0 0
    %605 = vmatprep.subr.bf16.mxu0 0
    %606 = vmatpush1.bf16.msra.mxu0 0
    %607 = vmatprep.subr.bf16.mxu0 0
    %608 = vmatpush1.bf16.msra.mxu0 0
    %609 = vmatprep.subr.bf16.mxu0 0
    %610 = vmatpush1.bf16.msra.mxu0 0
    %611 = vmatprep.subr.bf16.mxu0 0
    %612 = vmatpush1.bf16.msra.mxu0 0
    %613 = vmatprep.subr.bf16.mxu0 0
    %614 = vmatpush1.bf16.msra.mxu0 0
    %615 = vmatprep.mubr.bf16.mxu0 0
    %616 = vmatmul.mubr.bf16.gmra.mrb[0].mxu0 %v540
    %v617 = vpop.f32.mrb[0].mxu0
    %v618 = vadd.f32 %v309, %v617
    %v619 = vpop.f32.mrb[0].mxu0
    %v620 = vadd.f32 %v313, %v619
    %v621 = vpop.f32.mrb[0].mxu0
    %v622 = vpop.f32.mrb[0].mxu0
    %623 = vdwg.mxu0
    %624 = vmatprep.subr.bf16.mxu0 %v479
    %625 = vmatpush1.bf16.msra.mxu0 %v478
    %626 = vmatprep.subr.bf16.mxu0 %v495
    %627 = vmatpush1.bf16.msra.mxu0 %v494
    %628 = vmatprep.subr.bf16.mxu0 0
    %629 = vmatpush1.bf16.msra.mxu0 0
    %630 = vmatprep.subr.bf16.mxu0 0
    %631 = vmatpush1.bf16.msra.mxu0 0
    %632 = vmatprep.subr.bf16.mxu0 0
    %633 = vmatpush1.bf16.msra.mxu0 0
    %634 = vmatprep.subr.bf16.mxu0 0
    %635 = vmatpush1.bf16.msra.mxu0 0
    %636 = vmatprep.subr.bf16.mxu0 0
    %637 = vmatpush1.bf16.msra.mxu0 0
    %638 = vmatprep.subr.bf16.mxu0 0
    %639 = vmatpush1.bf16.msra.mxu0 0
    %640 = vmatprep.subr.bf16.mxu0 0
    %641 = vmatpush1.bf16.msra.mxu0 0
    %642 = vmatprep.subr.bf16.mxu0 0
    %643 = vmatpush1.bf16.msra.mxu0 0
    %644 = vmatprep.subr.bf16.mxu0 0
    %645 = vmatpush1.bf16.msra.mxu0 0
    %646 = vmatprep.subr.bf16.mxu0 0
    %647 = vmatpush1.bf16.msra.mxu0 0
    %648 = vmatprep.subr.bf16.mxu0 0
    %649 = vmatpush1.bf16.msra.mxu0 0
    %650 = vmatprep.subr.bf16.mxu0 0
    %651 = vmatpush1.bf16.msra.mxu0 0
    %652 = vmatprep.subr.bf16.mxu0 0
    %653 = vmatpush1.bf16.msra.mxu0 0
    %654 = vmatprep.subr.bf16.mxu0 0
    %655 = vmatpush1.bf16.msra.mxu0 0
    %656 = vmatprep.mubr.bf16.mxu0 0
    %657 = vmatmul.mubr.bf16.gmra.mrb[0].mxu0 %v540
    %v658 = vpop.f32.mrb[0].mxu0
    %v659 = vadd.f32 %v317, %v658
    %v660 = vpop.f32.mrb[0].mxu0
    %v661 = vadd.f32 %v321, %v660
    %v662 = vpop.f32.mrb[0].mxu0
    %v663 = vpop.f32.mrb[0].mxu0
    %664 = vdwg.mxu0
    %665 = vmatprep.subr.bf16.mxu0 %v481
    %666 = vmatpush1.bf16.msra.mxu0 %v480
    %667 = vmatprep.subr.bf16.mxu0 %v497
    %668 = vmatpush1.bf16.msra.mxu0 %v496
    %669 = vmatprep.subr.bf16.mxu0 0
    %670 = vmatpush1.bf16.msra.mxu0 0
    %671 = vmatprep.subr.bf16.mxu0 0
    %672 = vmatpush1.bf16.msra.mxu0 0
    %673 = vmatprep.subr.bf16.mxu0 0
    %674 = vmatpush1.bf16.msra.mxu0 0
    %675 = vmatprep.subr.bf16.mxu0 0
    %676 = vmatpush1.bf16.msra.mxu0 0
    %677 = vmatprep.subr.bf16.mxu0 0
    %678 = vmatpush1.bf16.msra.mxu0 0
    %679 = vmatprep.subr.bf16.mxu0 0
    %680 = vmatpush1.bf16.msra.mxu0 0
    %681 = vmatprep.subr.bf16.mxu0 0
    %682 = vmatpush1.bf16.msra.mxu0 0
    %683 = vmatprep.subr.bf16.mxu0 0
    %684 = vmatpush1.bf16.msra.mxu0 0
    %685 = vmatprep.subr.bf16.mxu0 0
    %686 = vmatpush1.bf16.msra.mxu0 0
    %687 = vmatprep.subr.bf16.mxu0 0
    %688 = vmatpush1.bf16.msra.mxu0 0
    %689 = vmatprep.subr.bf16.mxu0 0
    %690 = vmatpush1.bf16.msra.mxu0 0
    %691 = vmatprep.subr.bf16.mxu0 0
    %692 = vmatpush1.bf16.msra.mxu0 0
    %693 = vmatprep.subr.bf16.mxu0 0
    %694 = vmatpush1.bf16.msra.mxu0 0
    %695 = vmatprep.subr.bf16.mxu0 0
    %696 = vmatpush1.bf16.msra.mxu0 0
    %697 = vmatprep.mubr.bf16.mxu0 0
    %698 = vmatmul.mubr.bf16.gmra.mrb[0].mxu0 %v540
    %v699 = vpop.f32.mrb[0].mxu0
    %v700 = vadd.f32 %v325, %v699
    %v701 = vpop.f32.mrb[0].mxu0
    %v702 = vadd.f32 %v329, %v701
    %v703 = vpop.f32.mrb[0].mxu0
    %v704 = vpop.f32.mrb[0].mxu0
    %705 = vdwg.mxu0
    %706 = vmatprep.subr.bf16.mxu0 %v483
    %707 = vmatpush1.bf16.msra.mxu0 %v482
    %708 = vmatprep.subr.bf16.mxu0 %v499
    %709 = vmatpush1.bf16.msra.mxu0 %v498
    %710 = vmatprep.subr.bf16.mxu0 0
    %711 = vmatpush1.bf16.msra.mxu0 0
    %712 = vmatprep.subr.bf16.mxu0 0
    %713 = vmatpush1.bf16.msra.mxu0 0
    %714 = vmatprep.subr.bf16.mxu0 0
    %715 = vmatpush1.bf16.msra.mxu0 0
    %716 = vmatprep.subr.bf16.mxu0 0
    %717 = vmatpush1.bf16.msra.mxu0 0
    %718 = vmatprep.subr.bf16.mxu0 0
    %719 = vmatpush1.bf16.msra.mxu0 0
    %720 = vmatprep.subr.bf16.mxu0 0
    %721 = vmatpush1.bf16.msra.mxu0 0
    %722 = vmatprep.subr.bf16.mxu0 0
    %723 = vmatpush1.bf16.msra.mxu0 0
    %724 = vmatprep.subr.bf16.mxu0 0
    %725 = vmatpush1.bf16.msra.mxu0 0
    %726 = vmatprep.subr.bf16.mxu0 0
    %727 = vmatpush1.bf16.msra.mxu0 0
    %728 = vmatprep.subr.bf16.mxu0 0
    %729 = vmatpush1.bf16.msra.mxu0 0
    %730 = vmatprep.subr.bf16.mxu0 0
    %731 = vmatpush1.bf16.msra.mxu0 0
    %732 = vmatprep.subr.bf16.mxu0 0
    %733 = vmatpush1.bf16.msra.mxu0 0
    %734 = vmatprep.subr.bf16.mxu0 0
    %735 = vmatpush1.bf16.msra.mxu0 0
    %736 = vmatprep.subr.bf16.mxu0 0
    %737 = vmatpush1.bf16.msra.mxu0 0
    %738 = vmatprep.mubr.bf16.mxu0 0
    %739 = vmatmul.mubr.bf16.gmra.mrb[0].mxu0 %v540
    %v740 = vpop.f32.mrb[0].mxu0
    %v741 = vadd.f32 %v333, %v740
    %v742 = vpop.f32.mrb[0].mxu0
    %v743 = vadd.f32 %v337, %v742
    %v744 = vpop.f32.mrb[0].mxu0
    %v745 = vpop.f32.mrb[0].mxu0
    %746 = vdwg.mxu0
    %747 = vmatprep.subr.bf16.mxu0 %v485
    %748 = vmatpush1.bf16.msra.mxu0 %v484
    %749 = vmatprep.subr.bf16.mxu0 %v501
    %750 = vmatpush1.bf16.msra.mxu0 %v500
    %751 = vmatprep.subr.bf16.mxu0 0
    %752 = vmatpush1.bf16.msra.mxu0 0
    %753 = vmatprep.subr.bf16.mxu0 0
    %754 = vmatpush1.bf16.msra.mxu0 0
    %755 = vmatprep.subr.bf16.mxu0 0
    %756 = vmatpush1.bf16.msra.mxu0 0
    %757 = vmatprep.subr.bf16.mxu0 0
    %758 = vmatpush1.bf16.msra.mxu0 0
    %759 = vmatprep.subr.bf16.mxu0 0
    %760 = vmatpush1.bf16.msra.mxu0 0
    %761 = vmatprep.subr.bf16.mxu0 0
    %762 = vmatpush1.bf16.msra.mxu0 0
    %763 = vmatprep.subr.bf16.mxu0 0
    %764 = vmatpush1.bf16.msra.mxu0 0
    %765 = vmatprep.subr.bf16.mxu0 0
    %766 = vmatpush1.bf16.msra.mxu0 0
    %767 = vmatprep.subr.bf16.mxu0 0
    %768 = vmatpush1.bf16.msra.mxu0 0
    %769 = vmatprep.subr.bf16.mxu0 0
    %770 = vmatpush1.bf16.msra.mxu0 0
    %771 = vmatprep.subr.bf16.mxu0 0
    %772 = vmatpush1.bf16.msra.mxu0 0
    %773 = vmatprep.subr.bf16.mxu0 0
    %774 = vmatpush1.bf16.msra.mxu0 0
    %775 = vmatprep.subr.bf16.mxu0 0
    %776 = vmatpush1.bf16.msra.mxu0 0
    %777 = vmatprep.subr.bf16.mxu0 0
    %778 = vmatpush1.bf16.msra.mxu0 0
    %779 = vmatprep.mubr.bf16.mxu0 0
    %780 = vmatmul.mubr.bf16.gmra.mrb[0].mxu0 %v540
    %v781 = vpop.f32.mrb[0].mxu0
    %v782 = vadd.f32 %v341, %v781
    %v783 = vpop.f32.mrb[0].mxu0
    %v784 = vadd.f32 %v345, %v783
    %v785 = vpop.f32.mrb[0].mxu0
    %v786 = vpop.f32.mrb[0].mxu0
    %787 = vdwg.mxu0
    %788 = vmatprep.subr.bf16.mxu0 %v487
    %789 = vmatpush1.bf16.msra.mxu0 %v486
    %790 = vmatprep.subr.bf16.mxu0 %v503
    %791 = vmatpush1.bf16.msra.mxu0 %v502
    %792 = vmatprep.subr.bf16.mxu0 0
    %793 = vmatpush1.bf16.msra.mxu0 0
    %794 = vmatprep.subr.bf16.mxu0 0
    %795 = vmatpush1.bf16.msra.mxu0 0
    %796 = vmatprep.subr.bf16.mxu0 0
    %797 = vmatpush1.bf16.msra.mxu0 0
    %798 = vmatprep.subr.bf16.mxu0 0
    %799 = vmatpush1.bf16.msra.mxu0 0
    %800 = vmatprep.subr.bf16.mxu0 0
    %801 = vmatpush1.bf16.msra.mxu0 0
    %802 = vmatprep.subr.bf16.mxu0 0
    %803 = vmatpush1.bf16.msra.mxu0 0
    %804 = vmatprep.subr.bf16.mxu0 0
    %805 = vmatpush1.bf16.msra.mxu0 0
    %806 = vmatprep.subr.bf16.mxu0 0
    %807 = vmatpush1.bf16.msra.mxu0 0
    %808 = vmatprep.subr.bf16.mxu0 0
    %809 = vmatpush1.bf16.msra.mxu0 0
    %810 = vmatprep.subr.bf16.mxu0 0
    %811 = vmatpush1.bf16.msra.mxu0 0
    %812 = vmatprep.subr.bf16.mxu0 0
    %813 = vmatpush1.bf16.msra.mxu0 0
    %814 = vmatprep.subr.bf16.mxu0 0
    %815 = vmatpush1.bf16.msra.mxu0 0
    %816 = vmatprep.subr.bf16.mxu0 0
    %817 = vmatpush1.bf16.msra.mxu0 0
    %818 = vmatprep.subr.bf16.mxu0 0
    %819 = vmatpush1.bf16.msra.mxu0 0
    %820 = vmatprep.mubr.bf16.mxu0 0
    %821 = vmatmul.mubr.bf16.gmra.mrb[0].mxu0 %v540
    %v822 = vpop.f32.mrb[0].mxu0
    %v823 = vadd.f32 %v349, %v822
    %v824 = vpop.f32.mrb[0].mxu0
    %v825 = vadd.f32 %v353, %v824
    %v826 = vpop.f32.mrb[0].mxu0
    %v827 = vpop.f32.mrb[0].mxu0
    %828 = vdwg.mxu0
    %829 = vmatprep.subr.bf16.mxu0 %v489
    %830 = vmatpush1.bf16.msra.mxu0 %v488
    %831 = vmatprep.subr.bf16.mxu0 %v505
    %832 = vmatpush1.bf16.msra.mxu0 %v504
    %833 = vmatprep.subr.bf16.mxu0 0
    %834 = vmatpush1.bf16.msra.mxu0 0
    %835 = vmatprep.subr.bf16.mxu0 0
    %836 = vmatpush1.bf16.msra.mxu0 0
    %837 = vmatprep.subr.bf16.mxu0 0
    %838 = vmatpush1.bf16.msra.mxu0 0
    %839 = vmatprep.subr.bf16.mxu0 0
    %840 = vmatpush1.bf16.msra.mxu0 0
    %841 = vmatprep.subr.bf16.mxu0 0
    %842 = vmatpush1.bf16.msra.mxu0 0
    %843 = vmatprep.subr.bf16.mxu0 0
    %844 = vmatpush1.bf16.msra.mxu0 0
    %845 = vmatprep.subr.bf16.mxu0 0
    %846 = vmatpush1.bf16.msra.mxu0 0
    %847 = vmatprep.subr.bf16.mxu0 0
    %848 = vmatpush1.bf16.msra.mxu0 0
    %849 = vmatprep.subr.bf16.mxu0 0
    %850 = vmatpush1.bf16.msra.mxu0 0
    %851 = vmatprep.subr.bf16.mxu0 0
    %852 = vmatpush1.bf16.msra.mxu0 0
    %853 = vmatprep.subr.bf16.mxu0 0
    %854 = vmatpush1.bf16.msra.mxu0 0
    %855 = vmatprep.subr.bf16.mxu0 0
    %856 = vmatpush1.bf16.msra.mxu0 0
    %857 = vmatprep.subr.bf16.mxu0 0
    %858 = vmatpush1.bf16.msra.mxu0 0
    %859 = vmatprep.subr.bf16.mxu0 0
    %860 = vmatpush1.bf16.msra.mxu0 0
    %861 = vmatprep.mubr.bf16.mxu0 0
    %862 = vmatmul.mubr.bf16.gmra.mrb[0].mxu0 %v540
    %v863 = vpop.f32.mrb[0].mxu0
    %v864 = vadd.f32 %v357, %v863
    %v865 = vpop.f32.mrb[0].mxu0
    %v866 = vadd.f32 %v361, %v865
    %v867 = vpop.f32.mrb[0].mxu0
    %v868 = vpop.f32.mrb[0].mxu0
    %869 = vdwg.mxu0
    %v886 = vcombine.low %v577, %v579
    %v887 = vcombine.low %v618, %v620
    %v889 = vunpack.c.l.s4 1983009808
    %v890 = vunpack.c.0.s8 %v889
    %v891 = vlaneseq
    %v892 = vshrl.u32 %v891, 7
    %v893 = vsub.s32 %v890, %v892
    %v894 = vrot.slane %v886, %v893
    %v896 = vunpack.c.l.s4 1983009808
    %v897 = vunpack.c.0.s8 %v896
    %v898 = vlaneseq
    %v899 = vshrl.u32 %v898, 7
    %v900 = vsub.s32 %v897, %v899
    %v901 = vrot.slane %v887, %v900
    %v902 = vcombine.low %v894, %v901
    %v903 = vcombine.low %v659, %v661
    %v904 = vcombine.low %v700, %v702
    %v906 = vunpack.c.l.s4 1983009808
    %v907 = vunpack.c.0.s8 %v906
    %v908 = vlaneseq
    %v909 = vshrl.u32 %v908, 7
    %v910 = vsub.s32 %v907, %v909
    %v911 = vrot.slane %v903, %v910
    %v913 = vunpack.c.l.s4 1983009808
    %v914 = vunpack.c.0.s8 %v913
    %v915 = vlaneseq
    %v916 = vshrl.u32 %v915, 7
    %v917 = vsub.s32 %v914, %v916
    %v918 = vrot.slane %v904, %v917
    %v919 = vcombine.low %v911, %v918
    %v920 = vcombine.low %v741, %v743
    %v921 = vcombine.low %v782, %v784
    %v923 = vunpack.c.l.s4 1983009808
    %v924 = vunpack.c.0.s8 %v923
    %v925 = vlaneseq
    %v926 = vshrl.u32 %v925, 7
    %v927 = vsub.s32 %v924, %v926
    %v928 = vrot.slane %v920, %v927
    %v930 = vunpack.c.l.s4 1983009808
    %v931 = vunpack.c.0.s8 %v930
    %v932 = vlaneseq
    %v933 = vshrl.u32 %v932, 7
    %v934 = vsub.s32 %v931, %v933
    %v935 = vrot.slane %v921, %v934
    %v936 = vcombine.low %v928, %v935
    %v937 = vcombine.low %v823, %v825
    %v938 = vcombine.low %v864, %v866
    %v940 = vunpack.c.l.s4 1983009808
    %v941 = vunpack.c.0.s8 %v940
    %v942 = vlaneseq
    %v943 = vshrl.u32 %v942, 7
    %v944 = vsub.s32 %v941, %v943
    %v945 = vrot.slane %v937, %v944
    %v947 = vunpack.c.l.s4 1983009808
    %v948 = vunpack.c.0.s8 %v947
    %v949 = vlaneseq
    %v950 = vshrl.u32 %v949, 7
    %v951 = vsub.s32 %v948, %v950
    %v952 = vrot.slane %v938, %v951
    %v953 = vcombine.low %v945, %v952
    %958 = vst [vmem:[%s5] sm:$0xff] %v902
    %959 = vst [vmem:[%s5 + $0x8] sm:$0xff] %v919
    %960 = vst [vmem:[%s5 + $0x10] sm:$0xff] %v936
    %961 = vst [vmem:[%s5 + $0x18] sm:$0xff] %v953
    // Predicated region
    $region38: #{lstm_forward.1} parent=1 // pred_check
      _
    $region39: #{lstm_forward.1} parent=1 // pred_check_branch
      %963 = sbr.rel (0) target = $region41
    $region40: #{lstm_forward.1} parent=1 // pred_region
      _
    $region41: #{lstm_forward.1} parent=1 // pred_fallthru
      _
    // Predicated region
    $region42: #{lstm_forward.1} parent=1 // pred_check
      _
    $region43: #{lstm_forward.1} parent=1 // pred_check_branch
      %965 = sbr.rel (0) target = $region45
    $region44: #{lstm_forward.1} parent=1 // pred_region
      _
    $region45: #{lstm_forward.1} parent=1 // pred_fallthru
      _
    %966 = vsyncpa [#allocation3], 1
    %967 = vsyncpa [#allocation5], 1
    %968 = vsyncpa [#allocation8], 1

</llo_original>
